<compile_context>
chip_gen: v5e
topology: v5e:2x2
jax: 0.10.0
libtpu: 0.0.40
codegen_flags: <defaults>
</compile_context>

<pallas_src>
import jax
import jax.numpy as jnp
from jax import lax
from jax.experimental import pallas as pl
from jax.experimental.pallas import tpu as pltpu


def _mlp_kernel(z_ref, w1t_ref, b1_ref, w2_ref, b2_ref, out_ref):
    # z_ref  : (tb, 14)  natural batch-major tile (streamed from HBM)
    # w1t_ref: (32, 14)  first-layer weights, transposed (VMEM resident)
    # b1_ref : (32, 1)   first-layer bias column (broadcast over lanes)
    # w2_ref : (32, 1)   second-layer weight column
    # b2_ref : (1, 1)    second-layer bias (SMEM scalar)
    # out_ref: (1, tb)   lane-dense output slab
    #
    # h[c, b] = sum_f w1t[c, f] * z[b, f]  -> contract both minor dims (A@B^T)
    h = lax.dot_general(
        w1t_ref[...], z_ref[...],
        dimension_numbers=(((1,), (1,)), ((), ())),
        preferred_element_type=jnp.float32)            # (32, tb) on the MXU
    h = jnp.maximum(h + b1_ref[...], 0.0)              # bias + ReLU (VPU)
    # Second layer: 32 -> 1 as multiply + sublane reduce (keeps M=1 off MXU).
    y = jnp.sum(h * w2_ref[...], axis=0, keepdims=True)   # (1, tb)
    out_ref[...] = (y + b2_ref[0, 0]).astype(out_ref.dtype)


def latent_predictor_x15(z, w1, b1, w2, b2, *, tb=16384):
    """Fused forward pass: ReLU(z @ w1 + b1) @ w2 + b2.

    z  : (B, 14) float32
    w1 : (14, 32)  b1 : (1, 32)  w2 : (32, 1)  b2 : (1, 1)
    returns (B, 1) float32
    """
    B, d_in = z.shape
    d_hid = w1.shape[1]

    # Tile choice:
    #  - B <= tb: one exact block (no raggedness, works for any B incl. B=8).
    #  - B  > tb: lane-aligned tile (multiple of 128 for the output block,
    #    multiple of 8 for the input block); final block may be ragged.
    if B <= tb:
        tb_eff = B
    else:
        tb_eff = max(128, (tb // 128) * 128)
    n_tiles = pl.cdiv(B, tb_eff)

    # Tiny parameter relayouts only (negligible HBM traffic); z is untouched.
    w1_t = w1.T                        # (32, 14)
    b1_c = b1.reshape(d_hid, 1)        # (32, 1)
    w2_c = w2.reshape(d_hid, 1)        # (32, 1)
    b2_s = b2.reshape(1, 1)            # (1, 1) -> SMEM

    flops = 2 * B * (d_in * d_hid + d_hid)
    bytes_accessed = (B * (d_in + 1) * 4
                      + (w1.size + b1.size + w2.size + b2.size) * 4)

    out = pl.pallas_call(
        _mlp_kernel,
        out_shape=jax.ShapeDtypeStruct((1, B), jnp.float32),
        grid=(n_tiles,),
        in_specs=[
            pl.BlockSpec((tb_eff, d_in), lambda i: (i, 0)),       # z (streamed)
            pl.BlockSpec((d_hid, d_in), lambda i: (0, 0)),        # w1^T (resident)
            pl.BlockSpec((d_hid, 1), lambda i: (0, 0)),           # b1 (resident)
            pl.BlockSpec((d_hid, 1), lambda i: (0, 0)),           # w2 (resident)
            pl.BlockSpec(memory_space=pltpu.MemorySpace.SMEM),    # b2 scalar
        ],
        out_specs=pl.BlockSpec((1, tb_eff), lambda i: (0, i)),
        compiler_params=pltpu.CompilerParams(
            dimension_semantics=("parallel",),       # megacore-shardable on v7x
            vmem_limit_bytes=48 * 1024 * 1024,       # lane-padded z bufs > v5e's 16 MiB default
        ),
        cost_estimate=pl.CostEstimate(
            flops=flops, transcendentals=0, bytes_accessed=bytes_accessed),
    )(z, w1_t, b1_c, w2_c, b2_s)

    return out.reshape(B, 1)


def init_params(key):
    """Deterministic parameter init mimicking torch.nn.Linear defaults
    (uniform in +/- 1/sqrt(fan_in))."""
    k1, k2, k3, k4 = jax.random.split(key, 4)
    in1, hid, out = 14, 32, 1
    bound1 = 1.0 / jnp.sqrt(jnp.float32(in1))
    bound2 = 1.0 / jnp.sqrt(jnp.float32(hid))
    # Stored as (in, out) so the reference computes x @ W.
    w1 = jax.random.uniform(k1, (in1, hid), jnp.float32, -bound1, bound1)
    b1 = jax.random.uniform(k2, (1, hid), jnp.float32, -bound1, bound1)
    w2 = jax.random.uniform(k3, (hid, out), jnp.float32, -bound2, bound2)
    b2 = jax.random.uniform(k4, (1, out), jnp.float32, -bound2, bound2)
    return w1, b1, w2, b2


def reference_forward(z, w1, b1, w2, b2):
    h = jnp.maximum(z @ w1 + b1, 0.0)
    return h @ w2 + b2


if __name__ == "__main__":
    key = jax.random.PRNGKey(0)
    kz, kp = jax.random.split(key)

    batch = 8
    z = jax.random.normal(kz, (batch, 14), jnp.float32)
    w1, b1, w2, b2 = init_params(kp)

    out = latent_predictor_x15(z, w1, b1, w2, b2)
    out = jax.block_until_ready(out)

    ref = reference_forward(z, w1, b1, w2, b2)
    assert out.shape == (batch, 1)
    assert jnp.allclose(out, ref, atol=1e-5, rtol=1e-5)

    print("KERNEL_OK")
</pallas_src>

<mosaic_0001>
module attributes {stable_mosaic.version = 11 : i64} {
  func.func @_mlp_kernel(%arg0: i32, %arg1: memref<8x14xf32, #tpu.memory_space<vmem>>, %arg2: memref<32x14xf32, #tpu.memory_space<vmem>>, %arg3: memref<32x1xf32, #tpu.memory_space<vmem>>, %arg4: memref<32x1xf32, #tpu.memory_space<vmem>>, %arg5: memref<1x1xf32, #tpu.memory_space<smem>>, %arg6: memref<1x8xf32, #tpu.memory_space<vmem>>) attributes {dimension_semantics = [#tpu.dimension_semantics<parallel>], iteration_bounds = array<i64: 1>, scalar_prefetch = 0 : i64, scratch_operands = 0 : i64, tpu.core_type = #tpu.core_type<tc>, window_params = [{transform_indices = @transform_0, window_bounds = array<i64: 8, 14>}, {pipeline_mode = #tpu.pipeline_mode<synchronous>, transform_indices = @transform_1, window_bounds = array<i64: 32, 14>}, {pipeline_mode = #tpu.pipeline_mode<synchronous>, transform_indices = @transform_2, window_bounds = array<i64: 32, 1>}, {pipeline_mode = #tpu.pipeline_mode<synchronous>, transform_indices = @transform_3, window_bounds = array<i64: 32, 1>}, {transform_indices = @transform_4, window_bounds = array<i64: 1, 1>}, {transform_indices = @transform_5, window_bounds = array<i64: 1, 8>}]} {
    %c0 = arith.constant 0 : index
    %c0_0 = arith.constant 0 : index
    %0 = vector.load %arg2[%c0, %c0_0] : memref<32x14xf32, #tpu.memory_space<vmem>>, vector<32x14xf32>
    %c0_1 = arith.constant 0 : index
    %c0_2 = arith.constant 0 : index
    %1 = vector.load %arg1[%c0_1, %c0_2] : memref<8x14xf32, #tpu.memory_space<vmem>>, vector<8x14xf32>
    %cst = arith.constant dense<0.000000e+00> : vector<32x8xf32>
    %2 = tpu.matmul %0, %1, %cst {dimension_numbers = #tpu.dot_dimension_numbers<[1], [1], [0], [0], [0, 0, 1, 0], [], []>} : vector<32x14xf32>, vector<8x14xf32>, vector<32x8xf32> -> vector<32x8xf32>
    %c0_3 = arith.constant 0 : index
    %c0_4 = arith.constant 0 : index
    %3 = vector.load %arg3[%c0_3, %c0_4] : memref<32x1xf32, #tpu.memory_space<vmem>>, vector<32x1xf32>
    %4 = vector.broadcast %3 : vector<32x1xf32> to vector<32x8xf32>
    %5 = arith.addf %2, %4 : vector<32x8xf32>
    %cst_5 = arith.constant 0.000000e+00 : f32
    %6 = vector.broadcast %cst_5 : f32 to vector<32x8xf32>
    %7 = arith.maximumf %5, %6 : vector<32x8xf32>
    %c0_6 = arith.constant 0 : index
    %c0_7 = arith.constant 0 : index
    %8 = vector.load %arg4[%c0_6, %c0_7] : memref<32x1xf32, #tpu.memory_space<vmem>>, vector<32x1xf32>
    %9 = vector.broadcast %8 : vector<32x1xf32> to vector<32x8xf32>
    %10 = arith.mulf %7, %9 : vector<32x8xf32>
    %cst_8 = arith.constant dense<0.000000e+00> : vector<8xf32>
    %11 = vector.multi_reduction <add>, %10, %cst_8 [0] : vector<32x8xf32> to vector<8xf32>
    %12 = vector.shape_cast %11 : vector<8xf32> to vector<1x8xf32>
    %c0_9 = arith.constant 0 : index
    %c0_10 = arith.constant 0 : index
    %13 = memref.load %arg5[%c0_9, %c0_10] : memref<1x1xf32, #tpu.memory_space<smem>>
    %14 = vector.broadcast %13 : f32 to vector<1x8xf32>
    %15 = arith.addf %12, %14 : vector<1x8xf32>
    %c0_11 = arith.constant 0 : index
    %c0_12 = arith.constant 0 : index
    %16 = vector.load %arg6[%c0_11, %c0_12] : memref<1x8xf32, #tpu.memory_space<vmem>>, vector<1x8xf32>
    tpu.vector_store %arg6[%c0_11, %c0_12], %15 {strides = array<i32>} : memref<1x8xf32, #tpu.memory_space<vmem>>, vector<1x8xf32>,
    return
  }
  func.func @transform_0(%arg0: i32) -> (i32, i32) {
    %c0_i32 = arith.constant 0 : i32
    %c0_i32_0 = arith.constant 0 : i32
    return %arg0, %c0_i32 : i32, i32
  }
  func.func @transform_1(%arg0: i32) -> (i32, i32) {
    %c0_i32 = arith.constant 0 : i32
    %c0_i32_0 = arith.constant 0 : i32
    %c0_i32_1 = arith.constant 0 : i32
    return %c0_i32, %c0_i32_0 : i32, i32
  }
  func.func @transform_2(%arg0: i32) -> (i32, i32) {
    %c0_i32 = arith.constant 0 : i32
    %c0_i32_0 = arith.constant 0 : i32
    %c0_i32_1 = arith.constant 0 : i32
    return %c0_i32, %c0_i32_0 : i32, i32
  }
  func.func @transform_3(%arg0: i32) -> (i32, i32) {
    %c0_i32 = arith.constant 0 : i32
    %c0_i32_0 = arith.constant 0 : i32
    %c0_i32_1 = arith.constant 0 : i32
    return %c0_i32, %c0_i32_0 : i32, i32
  }
  func.func @transform_4(%arg0: i32) -> (i32, i32) {
    %c0_i32 = arith.constant 0 : i32
    %c0_i32_0 = arith.constant 0 : i32
    %c0_i32_1 = arith.constant 0 : i32
    return %c0_i32, %c0_i32_0 : i32, i32
  }
  func.func @transform_5(%arg0: i32) -> (i32, i32) {
    %c0_i32 = arith.constant 0 : i32
    %c0_i32_0 = arith.constant 0 : i32
    return %c0_i32, %arg0 : i32, i32
  }
}

</mosaic_0001>

<llo_original>
// kernel: tpu_custom_call.1
$region0: #{tpu_custom_call.1}
  #allocation0 [shape = 'u32[]', space=smem, size = 0x4, offset = 0x4, fixed_abs, tag = 'smem constant byte address 0x4 - core index']
  #allocation1 [shape = 'u32[72,128]{1,0:T(1,128)}', space=vmem, size = 0x9000, scoped, tag = 'internal scratch']
  #allocation2 [shape = 'f32[1,1]{1,0:T(1,128)S(6)}', space=smem, size = 0x200, scoped, tag = 'scoped memory for tpu_custom_call.1']
  %s0 = inlined_call_operand.vmem [shape: f32[8,14], index: 0, kind: input, shape index: {}]
  %s1 = inlined_call_operand.vmem [shape: f32[32,14], index: 1, kind: input, shape index: {}]
  %s2 = inlined_call_operand.vmem [shape: f32[32,1], index: 2, kind: input, shape index: {}]
  %s3 = inlined_call_operand.vmem [shape: f32[32,1], index: 3, kind: input, shape index: {}]
  %s4 = inlined_call_operand.<no memory space> [shape: f32[1,1], index: 4, kind: input, shape index: {}]
  %s5 = inlined_call_operand.hbm [shape: f32[1,8], index: 5, kind: output, shape index: {}]
  %s6 = sld [smem:[#allocation0]]
  $region30: #{tpu_custom_call.1} parent=0
    _
  %s8 = ssub.s32 1, %s6
  %s9 = scalar_select 0, %s8, %s6
  %10 = sst [smem:[#allocation2]] %s4
  $region1: #{tpu_custom_call.1} parent=0
    #allocation3 [shape = 'u8[512]{0}', space=vmem, size = 0x400, scoped, tag = 'output window, operand 0, single buffered']
    #allocation4 [shape = 's32[1]{0}', space=sflag, size = 0x4, scoped, tag = 'scoped memory for tpu_custom_call.1']
    %11 = vsyncpa [#allocation4], 0
    // Predicated region
    $region2: #{tpu_custom_call.1} parent=1 // pred_check
      _
    $region3: #{tpu_custom_call.1} parent=1 // pred_check_branch
      %13 = sbr.rel (0) target = $region5
    $region4: #{tpu_custom_call.1} parent=1 // pred_region
      _
    $region5: #{tpu_custom_call.1} parent=1 // pred_fallthru
      _
    // Predicated region
    $region6: #{tpu_custom_call.1} parent=1 // pred_check
      _
    $region7: #{tpu_custom_call.1} parent=1 // pred_check_branch
      %15 = sbr.rel (0) target = $region9
    $region8: #{tpu_custom_call.1} parent=1 // pred_region
      _
    $region9: #{tpu_custom_call.1} parent=1 // pred_fallthru
      _
    // Predicated region
    $region10: #{tpu_custom_call.1} parent=1 // pred_check
      _
    $region11: #{tpu_custom_call.1} parent=1 // pred_check_branch
      %17 = sbr.rel (0) target = $region13
    $region12: #{tpu_custom_call.1} parent=1 // pred_region
      _
    $region13: #{tpu_custom_call.1} parent=1 // pred_fallthru
      _
    // Predicated region
    $region14: #{tpu_custom_call.1} parent=1 // pred_check
      _
    $region15: #{tpu_custom_call.1} parent=1 // pred_check_branch
      %19 = sbr.rel (0) target = $region17
    $region16: #{tpu_custom_call.1} parent=1 // pred_region
      _
    $region17: #{tpu_custom_call.1} parent=1 // pred_fallthru
      _
    // Predicated region
    $region18: #{tpu_custom_call.1} parent=1 // pred_check
      _
    $region19: #{tpu_custom_call.1} parent=1 // pred_check_branch
      %21 = sbr.rel (0) target = $region21
    $region20: #{tpu_custom_call.1} parent=1 // pred_region
      _
    $region21: #{tpu_custom_call.1} parent=1 // pred_fallthru
      _
    %v22 = vld [vmem:[%s1] sm:$0xff]
    %v23 = vld [vmem:[%s1 + $0x8] sm:$0xff]
    %v24 = vld [vmem:[%s1 + $0x10] sm:$0xff]
    %v25 = vld [vmem:[%s1 + $0x18] sm:$0xff]
    %v26 = vld [vmem:[%s0] sm:$0xff]
    %v27 = vld [vmem:[%s2] sm:$0xff]
    %v28 = vld [vmem:[%s2 + $0x8] sm:$0xff]
    %v29 = vld [vmem:[%s2 + $0x10] sm:$0xff]
    %v30 = vld [vmem:[%s2 + $0x18] sm:$0xff]
    %32 = vset.pattern.permute.xlu0 0
    %33 = vperm.xlu0 %32, %v27
    %v34 = vpop.permute.xlu0 %33
    %37 = vset.pattern.permute.xlu0 0
    %38 = vperm.xlu0 %37, %v28
    %v39 = vpop.permute.xlu0 %38
    %42 = vset.pattern.permute.xlu0 0
    %43 = vperm.xlu0 %42, %v29
    %v44 = vpop.permute.xlu0 %43
    %47 = vset.pattern.permute.xlu0 0
    %48 = vperm.xlu0 %47, %v30
    %v49 = vpop.permute.xlu0 %48
    %vm51 = vcmask 113664
    %v53 = vsel %vm51, %v22, 0
    %v56 = vsel %vm51, %v23, 0
    %v59 = vsel %vm51, %v24, 0
    %v62 = vsel %vm51, %v25, 0
    %v65 = vsel %vm51, %v26, 0
    %67 = vmatpush.xpose.msra.mxu0 0.0
    %68 = vmatpush.xpose.msra.mxu0 0.0
    %69 = vmatpush.xpose.msra.mxu0 0.0
    %70 = vmatpush.xpose.msra.mxu0 0.0
    %71 = vmatpush.xpose.msra.mxu0 0.0
    %72 = vmatpush.xpose.msra.mxu0 0.0
    %73 = vmatpush.xpose.msra.mxu0 0.0
    %74 = vmatpush.xpose.msra.mxu0 0.0
    %75 = vmatpush.xpose.msra.mxu0 0.0
    %76 = vmatpush.xpose.msra.mxu0 0.0
    %77 = vmatpush.xpose.msra.mxu0 0.0
    %78 = vmatpush.xpose.msra.mxu0 0.0
    %79 = vmatpush.xpose.msra.mxu0 0.0
    %80 = vmatpush.xpose.msra.mxu0 0.0
    %81 = vmatpush.xpose.msra.mxu0 0.0
    %82 = vmatpush.xpose.msra.mxu0 %v65
    %83 = vmatmul.f32.gmra.mxu0 %v53
    %v84 = vpop.f32.mrf.mxu0
    %v85 = vadd.f32 %v34, %v84
    %86 = vmatmul.f32.gmra.mxu0 %v56
    %v87 = vpop.f32.mrf.mxu0
    %v88 = vadd.f32 %v39, %v87
    %89 = vmatmul.f32.gmra.mxu0 %v59
    %v90 = vpop.f32.mrf.mxu0
    %v91 = vadd.f32 %v44, %v90
    %92 = vmatmul.f32.gmra.mxu0 %v62
    %v93 = vpop.f32.mrf.mxu0
    %v94 = vadd.f32 %v49, %v93
    %95 = vdwg.mxu0
    %v96 = vmax.f32 %v85, 0.0
    %v97 = vmax.f32 %v88, 0.0
    %v98 = vmax.f32 %v91, 0.0
    %v99 = vmax.f32 %v94, 0.0
    %v100 = vld [vmem:[%s3] sm:$0xff]
    %v101 = vld [vmem:[%s3 + $0x8] sm:$0xff]
    %v102 = vld [vmem:[%s3 + $0x10] sm:$0xff]
    %v103 = vld [vmem:[%s3 + $0x18] sm:$0xff]
    %105 = vset.pattern.permute.xlu0 0
    %106 = vperm.xlu0 %105, %v100
    %v107 = vpop.permute.xlu0 %106
    %110 = vset.pattern.permute.xlu0 0
    %111 = vperm.xlu0 %110, %v101
    %v112 = vpop.permute.xlu0 %111
    %115 = vset.pattern.permute.xlu0 0
    %116 = vperm.xlu0 %115, %v102
    %v117 = vpop.permute.xlu0 %116
    %120 = vset.pattern.permute.xlu0 0
    %121 = vperm.xlu0 %120, %v103
    %v122 = vpop.permute.xlu0 %121
    %v124 = vmul.f32 %v96, %v107
    %v125 = vmul.f32 %v97, %v112
    %v126 = vmul.f32 %v98, %v117
    %v127 = vmul.f32 %v99, %v122
    %vm128 = vcmask 64512
    %v129 = vsel %vm128, %v124, 0.0
    %v130 = vsel %vm128, %v125, 0.0
    %v131 = vadd.f32 %v129, %v130
    %v132 = vsel %vm128, %v126, 0.0
    %v133 = vadd.f32 %v131, %v132
    %v134 = vsel %vm128, %v127, 0.0
    %v135 = vadd.f32 %v133, %v134
    %v136 = vrot.slane %v135, 4
    %v137 = vadd.f32 %v135, %v136
    %v138 = vrot.slane %v137, 2
    %v139 = vadd.f32 %v137, %v138
    %v140 = vrot.slane %v139, 1
    %v141 = vadd.f32 %v139, %v140
    %s142 = sld [smem:[#allocation2]]
    %v143 = vstv %s142
    %v144 = vadd.f32 %v141, %v143
    %vm145 = vcmask 57344
    %146 = vst.msk [vmem:[#allocation3] sm:$0x1] %vm145, %v144
    // Predicated region
    $region22: #{tpu_custom_call.1} parent=1 // pred_check
      _
    $region23: #{tpu_custom_call.1} parent=1 // pred_check_branch
      %148 = sbr.rel (0) target = $region25
    $region24: #{tpu_custom_call.1} parent=1 // pred_region
      %150 = vsyncadd [#allocation4], 0
      %s152 = sshll.u32 [#allocation3], 4
      %s153 = int_to_ptr.vmem [resolvable:$true] %s152
      %s154 = sshll.u32 %s5, 4
      %s155 = int_to_ptr.hbm [resolvable:$true] %s154
      %157 = dma.vmem_to_hbm [thread:$0]  %s153, 16, %s155, [#allocation4]
    $region25: #{tpu_custom_call.1} parent=1 // pred_fallthru
      _
    // Predicated region
    $region26: #{tpu_custom_call.1} parent=1 // pred_check
      _
    $region27: #{tpu_custom_call.1} parent=1 // pred_check_branch
      %159 = sbr.rel (0) target = $region29
    $region28: #{tpu_custom_call.1} parent=1 // pred_region
      %161 = dma.done [#allocation4], 16
    $region29: #{tpu_custom_call.1} parent=1 // pred_fallthru
      _
    %162 = vsyncpa [#allocation4], 1

</llo_original>
